<compile_context>
chip_gen: v7x
topology: tpu7x:2x2x1
jax: 0.10.0
libtpu: 0.0.40
codegen_flags: <defaults>
</compile_context>

<pallas_src>
import numpy as np
import jax
import jax.numpy as jnp
from jax.experimental import pallas as pl
from jax.experimental.pallas import tpu as pltpu

BATCH = 8
IN_VAR = 4
FEATURES = 40
FINAL_VAR = 4

PAD = 64                 # each F=40 block is zero-padded to a 64-lane-aligned block
HALF = 2 * PAD           # 128: [exp block | cos block] boundary (one vreg column each)
WIDE = 4 * PAD           # 256: packed matmul output width for the complex layers
L1_BIAS_ROW = 8          # L1 bias row index (sublane-aligned; rows IN_VAR..7 are zero)


def layered_model_kernel(x_ref, w1a_ref, w2a_ref, w3a_ref, out_ref):
    f32 = jnp.float32
    x = x_ref[...]                                            # (tb, IN_VAR)

    # ---- Layer 1: complex Linear + complex exp ----
    # z1 = [zr | zr | zi | zi-pi/2]; one exp over lanes 0:128, one cos over 128:256.
    z1 = (jnp.dot(x, w1a_ref[0:IN_VAR, :], preferred_element_type=f32)
          + w1a_ref[L1_BIAS_ROW:L1_BIAS_ROW + 1, :])          # (tb, 256)
    a = jnp.exp(z1[:, :HALF]) * jnp.cos(z1[:, HALF:])         # (tb, 128): [re |1| im |1]

    # ---- Layer 2: complex Linear ([[r,i],[-i,r]] real encoding, pad rows zero) + exp ----
    z2 = (jnp.dot(a, w2a_ref[0:HALF, :], preferred_element_type=f32)
          + w2a_ref[HALF:HALF + 1, :])                        # (tb, 256)
    h = jnp.exp(z2[:, :HALF]) * jnp.cos(z2[:, HALF:])         # (tb, 128): [re |1| im |1]

    # ---- CReLU (pad lanes stay finite: relu(1)=1); Dropout = identity at inference ----
    c = jnp.maximum(h, 0.0)

    # ---- Final layer: real weights, block-diagonal packing -> z3 = [z3_re | z3_im];
    #      output = Re(exp(z3)) = exp(re)*cos(im) ----
    z3 = (jnp.dot(c, w3a_ref[0:HALF, :], preferred_element_type=f32)
          + w3a_ref[HALF:HALF + 1, :])                        # (tb, 8)
    out_ref[...] = jnp.exp(z3[:, :FINAL_VAR]) * jnp.cos(z3[:, FINAL_VAR:])


def pack_params(params):
    """Pack 10 raw tensors into 3 lane-aligned buffers.

    Column blocks (64 lanes each, valid width F=40, zero padding):
      [0:64) -> zr    [64:128) -> zr (copy)    [128:192) -> zi    [192:256) -> zi - pi/2
    so  exp(z[:, :128]) * cos(z[:, 128:256]) == [Re(exp(z)) | Im(exp(z))]
    with re at lanes 0:40 and im at lanes 64:104; pad lanes evaluate to exp(0)*cos(0)=1
    and hit all-zero rows of the next packed weight, contributing nothing.
    """
    (w1r, w1i, b1r, b1i, w2r, w2i, b2r, b2i, w3, b3) = params
    F = FEATURES
    half_pi = np.float32(np.pi / 2.0)

    def cols(j):                       # valid lanes of 64-wide output block j
        return slice(j * PAD, j * PAD + F)

    rre = slice(0, F)                  # "re" rows of the packed [re|im] activation
    rim = slice(PAD, PAD + F)          # "im" rows

    # Layer 1: (9, 256); rows 0:IN_VAR weights, row 8 bias (sublane-aligned), rest zero.
    w1a = jnp.zeros((L1_BIAS_ROW + 1, WIDE), jnp.float32)
    w1a = w1a.at[:IN_VAR, cols(0)].set(w1r)
    w1a = w1a.at[:IN_VAR, cols(1)].set(w1r)
    w1a = w1a.at[:IN_VAR, cols(2)].set(w1i)
    w1a = w1a.at[:IN_VAR, cols(3)].set(w1i)
    w1a = w1a.at[L1_BIAS_ROW, cols(0)].set(b1r[0])
    w1a = w1a.at[L1_BIAS_ROW, cols(1)].set(b1r[0])
    w1a = w1a.at[L1_BIAS_ROW, cols(2)].set(b1i[0])
    w1a = w1a.at[L1_BIAS_ROW, cols(3)].set(b1i[0] - half_pi)

    # Layer 2: (129, 256); real encoding of the complex matmul, row 128 = packed bias.
    w2a = jnp.zeros((HALF + 1, WIDE), jnp.float32)
    w2a = w2a.at[rre, cols(0)].set(w2r)
    w2a = w2a.at[rre, cols(1)].set(w2r)
    w2a = w2a.at[rre, cols(2)].set(w2i)
    w2a = w2a.at[rre, cols(3)].set(w2i)
    w2a = w2a.at[rim, cols(0)].set(-w2i)
    w2a = w2a.at[rim, cols(1)].set(-w2i)
    w2a = w2a.at[rim, cols(2)].set(w2r)
    w2a = w2a.at[rim, cols(3)].set(w2r)
    w2a = w2a.at[HALF, cols(0)].set(b2r[0])
    w2a = w2a.at[HALF, cols(1)].set(b2r[0])
    w2a = w2a.at[HALF, cols(2)].set(b2i[0])
    w2a = w2a.at[HALF, cols(3)].set(b2i[0] - half_pi)

    # Layer 3: (129, 8); block-diagonal real weights, bias (real part only) at row 128.
    w3a = jnp.zeros((HALF + 1, 2 * FINAL_VAR), jnp.float32)
    w3a = w3a.at[rre, 0:FINAL_VAR].set(w3)
    w3a = w3a.at[rim, FINAL_VAR:2 * FINAL_VAR].set(w3)
    w3a = w3a.at[HALF, 0:FINAL_VAR].set(b3[0])
    return w1a, w2a, w3a


def _batch_tile(B):
    """Batch tile: large enough to amortize the ~0.35us/grid-step overhead,
    >= 2 grid steps at large B so ("parallel",) can shard across both v7x
    TensorCores, and a multiple of 8 whenever it is not the full batch."""
    TB_MAX = 2048                      # ~10 MiB live f32 intermediates; fits v7x's 64 MiB VMEM
    if B < 1024:
        return B                       # single step; tiny problem, overhead-dominated anyway
    tb = min(TB_MAX, -(-B // 2))       # at least two steps
    return -(-tb // 8) * 8             # sublane-align (block_shape (8,128) rule)


@jax.jit
def layered_model(x, params):
    w1a, w2a, w3a = pack_params(params)
    x = x.astype(jnp.float32)
    B = x.shape[0]
    TB = _batch_tile(B)
    grid = (pl.cdiv(B, TB),)
    # When B % TB != 0 the padded rows of the last x tile compute garbage
    # (possibly inf/nan) but are discarded by the pipeline writeback; out_ref is
    # never read in-kernel and rows are independent, so nothing propagates.
    return pl.pallas_call(
        layered_model_kernel,
        out_shape=jax.ShapeDtypeStruct((B, FINAL_VAR), jnp.float32),
        grid=grid,
        in_specs=[
            pl.BlockSpec((TB, IN_VAR), lambda i: (i, 0)),
            pl.BlockSpec(w1a.shape, lambda i: (0, 0)),   # resident across batch steps
            pl.BlockSpec(w2a.shape, lambda i: (0, 0)),
            pl.BlockSpec(w3a.shape, lambda i: (0, 0)),
        ],
        out_specs=pl.BlockSpec((TB, FINAL_VAR), lambda i: (i, 0)),
        compiler_params=pltpu.CompilerParams(
            dimension_semantics=("parallel",),
            vmem_limit_bytes=32 * 1024 * 1024,
        ),
    )(x, w1a, w2a, w3a)


def init_params(key):
    """Deterministic synthetic parameters. Weights stored as (in, out) so the
    kernel computes x @ W (== PyTorch's x @ W_torch.T)."""
    ks = jax.random.split(key, 10)
    u = lambda k, shape, s: jax.random.uniform(k, shape, jnp.float32, -s, s)
    w1r = u(ks[0], (IN_VAR, FEATURES), 0.10)
    w1i = u(ks[1], (IN_VAR, FEATURES), 0.10)
    b1r = u(ks[2], (1, FEATURES), 0.10)
    b1i = u(ks[3], (1, FEATURES), 0.10)
    w2r = u(ks[4], (FEATURES, FEATURES), 0.02)
    w2i = u(ks[5], (FEATURES, FEATURES), 0.02)
    b2r = u(ks[6], (1, FEATURES), 0.02)
    b2i = u(ks[7], (1, FEATURES), 0.02)
    w3 = u(ks[8], (FEATURES, FINAL_VAR), 0.01)
    b3 = u(ks[9], (1, FINAL_VAR), 0.01)
    return (w1r, w1i, b1r, b1i, w2r, w2i, b2r, b2i, w3, b3)


def reference_numpy(x, params):
    """Pure numpy complex reference matching the PyTorch forward (eval mode)."""
    (w1r, w1i, b1r, b1i, w2r, w2i, b2r, b2i, w3, b3) = [np.asarray(p) for p in params]
    xc = np.asarray(x).astype(np.complex64)
    w1 = (w1r + 1j * w1i).astype(np.complex64)
    b1 = (b1r + 1j * b1i).astype(np.complex64)
    w2 = (w2r + 1j * w2i).astype(np.complex64)
    b2 = (b2r + 1j * b2i).astype(np.complex64)

    h = np.exp(xc @ w1 + b1)                                      # PaddedLayer 1
    h = np.exp(h @ w2 + b2)                                       # PaddedLayer 2
    h = np.maximum(h.real, 0.0) + 1j * np.maximum(h.imag, 0.0)    # CReLU
    # Dropout: identity (eval)
    h = np.exp(h @ w3.astype(np.complex64) + b3)                  # final PaddedLayer
    return h.real.astype(np.float32)


if __name__ == "__main__":
    key = jax.random.PRNGKey(0)
    k_x, k_p, k_x2 = jax.random.split(key, 3)
    params = init_params(k_p)

    # Small-shape check (single grid step), as per the module's natural sizes.
    x_small = jax.random.normal(k_x, (BATCH, IN_VAR), dtype=jnp.float32)
    out_small = jax.block_until_ready(layered_model(x_small, params))
    np.testing.assert_allclose(np.asarray(out_small), reference_numpy(x_small, params),
                               rtol=1e-3, atol=1e-4)

    # Multi-step / resident-weight path (2 grid steps -> both TensorCores on v7x).
    x_big = jax.random.normal(k_x2, (2048, IN_VAR), dtype=jnp.float32)
    out_big = jax.block_until_ready(layered_model(x_big, params))
    np.testing.assert_allclose(np.asarray(out_big), reference_numpy(x_big, params),
                               rtol=1e-3, atol=1e-4)

    print("KERNEL_OK")
</pallas_src>

<mosaic_0001>
module attributes {stable_mosaic.version = 11 : i64} {
  func.func @layered_model_kernel(%arg0: i32, %arg1: memref<8x4xf32, #tpu.memory_space<vmem>>, %arg2: memref<9x256xf32, #tpu.memory_space<vmem>>, %arg3: memref<129x256xf32, #tpu.memory_space<vmem>>, %arg4: memref<129x8xf32, #tpu.memory_space<vmem>>, %arg5: memref<8x4xf32, #tpu.memory_space<vmem>>) attributes {dimension_semantics = [#tpu.dimension_semantics<parallel>], iteration_bounds = array<i64: 1>, scalar_prefetch = 0 : i64, scratch_operands = 0 : i64, tpu.core_type = #tpu.core_type<tc>, window_params = [{transform_indices = @transform_0, window_bounds = array<i64: 8, 4>}, {pipeline_mode = #tpu.pipeline_mode<synchronous>, transform_indices = @transform_1, window_bounds = array<i64: 9, 256>}, {pipeline_mode = #tpu.pipeline_mode<synchronous>, transform_indices = @transform_2, window_bounds = array<i64: 129, 256>}, {pipeline_mode = #tpu.pipeline_mode<synchronous>, transform_indices = @transform_3, window_bounds = array<i64: 129, 8>}, {transform_indices = @transform_4, window_bounds = array<i64: 8, 4>}]} {
    %c0 = arith.constant 0 : index
    %c0_0 = arith.constant 0 : index
    %0 = vector.load %arg1[%c0, %c0_0] : memref<8x4xf32, #tpu.memory_space<vmem>>, vector<8x4xf32>
    %c0_1 = arith.constant 0 : index
    %c0_2 = arith.constant 0 : index
    %1 = vector.load %arg2[%c0_1, %c0_2] : memref<9x256xf32, #tpu.memory_space<vmem>>, vector<4x256xf32>
    %cst = arith.constant dense<0.000000e+00> : vector<8x256xf32>
    %2 = tpu.matmul %0, %1, %cst {dimension_numbers = #tpu.dot_dimension_numbers<[1], [0], [0], [1], [0, 0, 1, 1], [], []>} : vector<8x4xf32>, vector<4x256xf32>, vector<8x256xf32> -> vector<8x256xf32>
    %c8 = arith.constant 8 : index
    %c0_3 = arith.constant 0 : index
    %3 = vector.load %arg2[%c8, %c0_3] : memref<9x256xf32, #tpu.memory_space<vmem>>, vector<1x256xf32>
    %4 = vector.broadcast %3 : vector<1x256xf32> to vector<8x256xf32>
    %5 = arith.addf %2, %4 : vector<8x256xf32>
    %6 = vector.extract_strided_slice %5 {offsets = [0, 0], sizes = [8, 128], strides = [1, 1]} : vector<8x256xf32> to vector<8x128xf32>
    %7 = math.exp %6 : vector<8x128xf32>
    %8 = vector.extract_strided_slice %5 {offsets = [0, 128], sizes = [8, 128], strides = [1, 1]} : vector<8x256xf32> to vector<8x128xf32>
    %9 = math.cos %8 : vector<8x128xf32>
    %10 = arith.mulf %7, %9 : vector<8x128xf32>
    %c0_4 = arith.constant 0 : index
    %c0_5 = arith.constant 0 : index
    %11 = vector.load %arg3[%c0_4, %c0_5] : memref<129x256xf32, #tpu.memory_space<vmem>>, vector<128x256xf32>
    %cst_6 = arith.constant dense<0.000000e+00> : vector<8x256xf32>
    %12 = tpu.matmul %10, %11, %cst_6 {dimension_numbers = #tpu.dot_dimension_numbers<[1], [0], [0], [1], [0, 0, 1, 1], [], []>} : vector<8x128xf32>, vector<128x256xf32>, vector<8x256xf32> -> vector<8x256xf32>
    %c128 = arith.constant 128 : index
    %c0_7 = arith.constant 0 : index
    %13 = vector.load %arg3[%c128, %c0_7] : memref<129x256xf32, #tpu.memory_space<vmem>>, vector<1x256xf32>
    %14 = vector.broadcast %13 : vector<1x256xf32> to vector<8x256xf32>
    %15 = arith.addf %12, %14 : vector<8x256xf32>
    %16 = vector.extract_strided_slice %15 {offsets = [0, 0], sizes = [8, 128], strides = [1, 1]} : vector<8x256xf32> to vector<8x128xf32>
    %17 = math.exp %16 : vector<8x128xf32>
    %18 = vector.extract_strided_slice %15 {offsets = [0, 128], sizes = [8, 128], strides = [1, 1]} : vector<8x256xf32> to vector<8x128xf32>
    %19 = math.cos %18 : vector<8x128xf32>
    %20 = arith.mulf %17, %19 : vector<8x128xf32>
    %cst_8 = arith.constant 0.000000e+00 : f32
    %21 = vector.broadcast %cst_8 : f32 to vector<8x128xf32>
    %22 = arith.maximumf %20, %21 : vector<8x128xf32>
    %c0_9 = arith.constant 0 : index
    %c0_10 = arith.constant 0 : index
    %23 = vector.load %arg4[%c0_9, %c0_10] : memref<129x8xf32, #tpu.memory_space<vmem>>, vector<128x8xf32>
    %cst_11 = arith.constant dense<0.000000e+00> : vector<8x8xf32>
    %24 = tpu.matmul %22, %23, %cst_11 {dimension_numbers = #tpu.dot_dimension_numbers<[1], [0], [0], [1], [0, 0, 1, 1], [], []>} : vector<8x128xf32>, vector<128x8xf32>, vector<8x8xf32> -> vector<8x8xf32>
    %c128_12 = arith.constant 128 : index
    %c0_13 = arith.constant 0 : index
    %25 = vector.load %arg4[%c128_12, %c0_13] : memref<129x8xf32, #tpu.memory_space<vmem>>, vector<1x8xf32>
    %26 = vector.broadcast %25 : vector<1x8xf32> to vector<8x8xf32>
    %27 = arith.addf %24, %26 : vector<8x8xf32>
    %28 = vector.extract_strided_slice %27 {offsets = [0, 0], sizes = [8, 4], strides = [1, 1]} : vector<8x8xf32> to vector<8x4xf32>
    %29 = math.exp %28 : vector<8x4xf32>
    %30 = vector.extract_strided_slice %27 {offsets = [0, 4], sizes = [8, 4], strides = [1, 1]} : vector<8x8xf32> to vector<8x4xf32>
    %31 = math.cos %30 : vector<8x4xf32>
    %32 = arith.mulf %29, %31 : vector<8x4xf32>
    %c0_14 = arith.constant 0 : index
    %c0_15 = arith.constant 0 : index
    %33 = vector.load %arg5[%c0_14, %c0_15] : memref<8x4xf32, #tpu.memory_space<vmem>>, vector<8x4xf32>
    tpu.vector_store %arg5[%c0_14, %c0_15], %32 {strides = array<i32>} : memref<8x4xf32, #tpu.memory_space<vmem>>, vector<8x4xf32>,
    return
  }
  func.func @transform_0(%arg0: i32) -> (i32, i32) {
    %c0_i32 = arith.constant 0 : i32
    %c0_i32_0 = arith.constant 0 : i32
    return %arg0, %c0_i32 : i32, i32
  }
  func.func @transform_1(%arg0: i32) -> (i32, i32) {
    %c0_i32 = arith.constant 0 : i32
    %c0_i32_0 = arith.constant 0 : i32
    %c0_i32_1 = arith.constant 0 : i32
    return %c0_i32, %c0_i32_0 : i32, i32
  }
  func.func @transform_2(%arg0: i32) -> (i32, i32) {
    %c0_i32 = arith.constant 0 : i32
    %c0_i32_0 = arith.constant 0 : i32
    %c0_i32_1 = arith.constant 0 : i32
    return %c0_i32, %c0_i32_0 : i32, i32
  }
  func.func @transform_3(%arg0: i32) -> (i32, i32) {
    %c0_i32 = arith.constant 0 : i32
    %c0_i32_0 = arith.constant 0 : i32
    %c0_i32_1 = arith.constant 0 : i32
    return %c0_i32, %c0_i32_0 : i32, i32
  }
  func.func @transform_4(%arg0: i32) -> (i32, i32) {
    %c0_i32 = arith.constant 0 : i32
    %c0_i32_0 = arith.constant 0 : i32
    return %arg0, %c0_i32 : i32, i32
  }
}

</mosaic_0001>

<llo_original>
// kernel: layered_model.1
$region0: #{layered_model.1}
  #allocation0 [shape = 'u32[]', space=smem, size = 0x4, offset = 0x4, fixed_abs, tag = 'smem constant byte address 0x4 - core index']
  #allocation1 [shape = 'u32[144,128]{1,0:T(1,128)}', space=vmem, size = 0x12000, scoped, tag = 'internal scratch']
  %s0 = inlined_call_operand.vmem [shape: f32[8,4], index: 0, kind: input, shape index: {}]
  %s1 = inlined_call_operand.vmem [shape: f32[9,256], index: 1, kind: input, shape index: {}]
  %s2 = inlined_call_operand.vmem [shape: f32[129,256], index: 2, kind: input, shape index: {}]
  %s3 = inlined_call_operand.vmem [shape: f32[129,8], index: 3, kind: input, shape index: {}]
  %s4 = inlined_call_operand.vmem [shape: f32[8,4], index: 4, kind: output, shape index: {}]
  %s5 = sld [smem:[#allocation0]]
  $region26: #{layered_model.1} parent=0
    _
  %s7 = ssub.s32 1, %s5
  %s8 = scalar_select 0, %s7, %s5
  // Predicated region
  $region2: #{layered_model.1} parent=0 // pred_check
    _
  $region3: #{layered_model.1} parent=0 // pred_check_branch
    %10 = sbr.rel (0) target = $region5
  $region4: #{layered_model.1} parent=0 // pred_region
    _
  $region5: #{layered_model.1} parent=0 // pred_fallthru
    _
  // Predicated region
  $region6: #{layered_model.1} parent=0 // pred_check
    _
  $region7: #{layered_model.1} parent=0 // pred_check_branch
    %12 = sbr.rel (0) target = $region9
  $region8: #{layered_model.1} parent=0 // pred_region
    _
  $region9: #{layered_model.1} parent=0 // pred_fallthru
    _
  // Predicated region
  $region10: #{layered_model.1} parent=0 // pred_check
    _
  $region11: #{layered_model.1} parent=0 // pred_check_branch
    %14 = sbr.rel (0) target = $region13
  $region12: #{layered_model.1} parent=0 // pred_region
    _
  $region13: #{layered_model.1} parent=0 // pred_fallthru
    _
  // Predicated region
  $region14: #{layered_model.1} parent=0 // pred_check
    _
  $region15: #{layered_model.1} parent=0 // pred_check_branch
    %16 = sbr.rel (0) target = $region17
  $region16: #{layered_model.1} parent=0 // pred_region
    _
  $region17: #{layered_model.1} parent=0 // pred_fallthru
    _
  %v17 = vld [vmem:[%s0] sm:$0xff]
  %v18 = vld [vmem:[%s1] sm:$0xf]
  %v19 = vld [vmem:[%s1 + $0x8] sm:$0xf]
  %s20 = scalar_lea.vmem %s1, 16
  %v21 = vld [vmem:[%s20] ss:$8 sm:$0x3]
  %v23 = vlaneseq
  %v24 = vshrl.u32 %v23, 7
  %v25 = vsub.s32 0, %v24
  %v26 = vrot.slane %v21, %v25
  %v27 = vlaneseq
  %v28 = vshrl.u32 %v27, 7
  %v29 = vsub.s32 1, %v28
  %v30 = vrot.slane %v21, %v29
  %vm33 = vcmask 31744
  %v35 = vsel %vm33, %v17, 0
  %vm37 = vcmask 1043456
  %v39 = vsel %vm37, %v18, 0
  %v42 = vsel %vm37, %v19, 0
  %44 = vmatprep.subr.mxu0 %v42
  %45 = vmatpush1.msra.mxu0 %v39
  %46 = vmatprep.subr.mxu0 0.0
  %47 = vmatpush1.msra.mxu0 0.0
  %48 = vmatprep.subr.mxu0 0.0
  %49 = vmatpush1.msra.mxu0 0.0
  %50 = vmatprep.subr.mxu0 0.0
  %51 = vmatpush1.msra.mxu0 0.0
  %52 = vmatprep.subr.mxu0 0.0
  %53 = vmatpush1.msra.mxu0 0.0
  %54 = vmatprep.subr.mxu0 0.0
  %55 = vmatpush1.msra.mxu0 0.0
  %56 = vmatprep.subr.mxu0 0.0
  %57 = vmatpush1.msra.mxu0 0.0
  %58 = vmatprep.subr.mxu0 0.0
  %59 = vmatpush1.msra.mxu0 0.0
  %60 = vmatprep.subr.mxu0 0.0
  %61 = vmatpush1.msra.mxu0 0.0
  %62 = vmatprep.subr.mxu0 0.0
  %63 = vmatpush1.msra.mxu0 0.0
  %64 = vmatprep.subr.mxu0 0.0
  %65 = vmatpush1.msra.mxu0 0.0
  %66 = vmatprep.subr.mxu0 0.0
  %67 = vmatpush1.msra.mxu0 0.0
  %68 = vmatprep.subr.mxu0 0.0
  %69 = vmatpush1.msra.mxu0 0.0
  %70 = vmatprep.subr.mxu0 0.0
  %71 = vmatpush1.msra.mxu0 0.0
  %72 = vmatprep.subr.mxu0 0.0
  %73 = vmatpush1.msra.mxu0 0.0
  %74 = vmatprep.subr.mxu0 0.0
  %75 = vmatpush1.msra.mxu0 0.0
  %76 = vmatprep.subr.mxu0 0.0
  %77 = vmatpush1.msra.mxu0 0.0
  %78 = vmatprep.subr.mxu0 0.0
  %79 = vmatpush1.msra.mxu0 0.0
  %80 = vmatprep.subr.mxu0 0.0
  %81 = vmatpush1.msra.mxu0 0.0
  %82 = vmatprep.subr.mxu0 0.0
  %83 = vmatpush1.msra.mxu0 0.0
  %84 = vmatprep.subr.mxu0 0.0
  %85 = vmatpush1.msra.mxu0 0.0
  %86 = vmatprep.subr.mxu0 0.0
  %87 = vmatpush1.msra.mxu0 0.0
  %88 = vmatprep.subr.mxu0 0.0
  %89 = vmatpush1.msra.mxu0 0.0
  %90 = vmatprep.subr.mxu0 0.0
  %91 = vmatpush1.msra.mxu0 0.0
  %92 = vmatprep.subr.mxu0 0.0
  %93 = vmatpush1.msra.mxu0 0.0
  %94 = vmatprep.subr.mxu0 0.0
  %95 = vmatpush1.msra.mxu0 0.0
  %96 = vmatprep.subr.mxu0 0.0
  %97 = vmatpush1.msra.mxu0 0.0
  %98 = vmatprep.subr.mxu0 0.0
  %99 = vmatpush1.msra.mxu0 0.0
  %100 = vmatprep.subr.mxu0 0.0
  %101 = vmatpush1.msra.mxu0 0.0
  %102 = vmatprep.subr.mxu0 0.0
  %103 = vmatpush1.msra.mxu0 0.0
  %104 = vmatprep.subr.mxu0 0.0
  %105 = vmatpush1.msra.mxu0 0.0
  %106 = vmatprep.subr.mxu0 0.0
  %107 = vmatpush1.msra.mxu0 0.0
  %108 = vmatprep.mubr.f32.mxu0 0.0
  %109 = vmatmul.mubr.f32.gmra.mrb[0].mxu0 %v35
  %v110 = vpop.f32.mrb[0].mxu0
  %v111 = vadd.f32 %v26, %v110
  %v112 = vpop.f32.mrb[0].mxu0
  %v113 = vadd.f32 %v30, %v112
  %114 = vdwg.mxu0
  %v115 = vmul.f32 %v111, 1.442695
  %v116 = vpow.pop %v115
  %v117 = vand.u32 2147483647, %v113
  %vm118 = vcmp.le.f32.partialorder %v117, 0.7853982
  %vm119 = vcmp.lt.s32.totalorder %v113, 0
  %v120 = vand.u32 %v113, 2139095040
  %v121 = vshrl.u32 %v120, 23
  %v122 = vsub.s32 %v121, 127
  %v123 = vand.u32 2147483647, %v113
  %v124 = vand.u32 %v123, 8388607
  %v125 = vor.u32 %v124, 8388608
  %v126 = vsub.s32 0, %v125
  %v127 = vadd.s32 %v122, 1
  %vm128 = vcmp.gt.s32.totalorder %v127, 0
  %v129 = vsel %vm128, %v127, 0
  %v130 = vshrl.u32 %v129, 5
  %v131 = vand.u32 %v129, 31
  %v132 = vsub.s32 32, %v131
  %v133 = vshrl.u32 683565275, %v132
  %v134 = vshll.u32 683565275, %v131
  %v135 = vshrl.u32 2475754826, %v132
  %v136 = vor.u32 %v134, %v135
  %v137 = vshll.u32 2475754826, %v131
  %v138 = vshrl.u32 2131351028, %v132
  %v139 = vor.u32 %v137, %v138
  %v140 = vshll.u32 2131351028, %v131
  %v141 = vshrl.u32 2102212464, %v132
  %v142 = vor.u32 %v140, %v141
  %v143 = vshll.u32 2102212464, %v131
  %v144 = vshrl.u32 920167782, %v132
  %v145 = vor.u32 %v143, %v144
  %v146 = vshll.u32 920167782, %v131
  %v147 = vshrl.u32 1326507024, %v132
  %v148 = vor.u32 %v146, %v147
  %vm149 = vcmp.lt.s32.totalorder %v130, 1
  %vm150 = vcmp.lt.s32.totalorder %v130, 2
  %vm151 = vcmp.lt.s32.totalorder %v130, 3
  %vm152 = vcmp.lt.s32.totalorder %v130, 4
  %v153 = vsel %vm149, %v133, %v136
  %v154 = vsel %vm152, %v142, 2102212464
  %v155 = vsel %vm151, %v139, %v154
  %v156 = vsel %vm150, %v153, %v155
  %v157 = vsel %vm149, %v136, %v139
  %v158 = vsel %vm152, %v145, 920167782
  %v159 = vsel %vm151, %v142, %v158
  %v160 = vsel %vm150, %v157, %v159
  %v161 = vsel %vm149, %v139, %v142
  %v162 = vsel %vm152, %v148, 1326507024
  %v163 = vsel %vm151, %v145, %v162
  %v164 = vsel %vm150, %v161, %v163
  %v165 = vshll.u32 %v125, 8
  %v166 = vmul.u32.u64.compose %v165, %v164
  %v167 = vextract.low.u32 %v166
  %v168 = vextract.high.u32 %v166
  %v169 = vmul.u32.u64.compose %v165, %v160
  %v170 = vextract.low.u32 %v169
  %v171 = vextract.high.u32 %v169
  %v172 = vmul.u32 %v165, %v156
  %v173 = vadd.s32 %v168, %v170
  %vm174 = vc.u32 %v168, %v170
  %v175 = vadd.s32 %v171, 1
  %v176 = vsel %vm174, %v175, %v171
  %v177 = vadd.s32 %v172, %v176
  %v178 = vadd.s32 %v177, 536870912
  %v179 = vshrl.u32 %v178, 30
  %v180 = vshll.u32 %v179, 30
  %v181 = vsub.s32 %v177, %v180
  %vm182 = vcmp.lt.s32.totalorder %v181, 0
  %v183 = vsub.s32 0, %v181
  %v184 = vsel %vm182, %v183, %v181
  %v185 = vclz %v184
  %v186 = vsub.s32 %v185, 2
  %vm187 = vcmp.gt.s32.totalorder 0, %v186
  %v188 = vsel %vm187, 0, %v186
  %v189 = vsub.s32 32, %v188
  %v190 = vshll.u32 %v181, %v188
  %v191 = vshrl.u32 %v173, %v189
  %v192 = vor.u32 %v190, %v191
  %v193 = vsub.s32 4294967266, %v188
  %v194 = vadd.s32 %v193, 127
  %v195 = vshll.u32 %v194, 23
  %v196 = vor.u32 4788187, %v195
  %v197 = vand.u32 2147483647, %v196
  %v199 = vcvt.s32.f32 %v192
  %v200 = vmul.f32 %v199, %v197
  %v201 = vxor.u32 %v200, 2147483648
  %v202 = vsel %vm119, %v201, %v200
  %v203 = vsub.s32 4, %v179
  %v204 = vsel %vm119, %v203, %v179
  %v205 = vsel %vm118, %v113, %v202
  %v206 = vsel %vm118, 0, %v204
  %v207 = vcosq.f32.pop %v205
  %v208 = vsinq.f32.pop %v205
  %vm209 = vweird.f32 %v113
  %v210 = vand.u32 %v206, 3
  %vm211 = vcmp.lt.s32.totalorder %v210, 2
  %vm212 = vcmp.eq.s32.totalorder %v210, 0
  %v213 = vxor.u32 %v208, 2147483648
  %v214 = vsel %vm212, %v207, %v213
  %vm215 = vcmp.eq.s32.totalorder %v210, 2
  %v216 = vxor.u32 %v207, 2147483648
  %v217 = vsel %vm215, %v216, %v208
  %v218 = vsel %vm211, %v214, %v217
  %v219 = vsel %vm209, nan, %v218
  %v220 = vmul.f32 %v116, %v219
  %v221 = vld [vmem:[%s2] sm:$0xff]
  %v222 = vld [vmem:[%s2 + $0x8] sm:$0xff]
  %v223 = vld [vmem:[%s2 + $0x10] sm:$0xff]
  %v224 = vld [vmem:[%s2 + $0x18] sm:$0xff]
  %v225 = vld [vmem:[%s2 + $0x20] sm:$0xff]
  %v226 = vld [vmem:[%s2 + $0x28] sm:$0xff]
  %v227 = vld [vmem:[%s2 + $0x30] sm:$0xff]
  %v228 = vld [vmem:[%s2 + $0x38] sm:$0xff]
  %v229 = vld [vmem:[%s2 + $0x40] sm:$0xff]
  %v230 = vld [vmem:[%s2 + $0x48] sm:$0xff]
  %v231 = vld [vmem:[%s2 + $0x50] sm:$0xff]
  %v232 = vld [vmem:[%s2 + $0x58] sm:$0xff]
  %v233 = vld [vmem:[%s2 + $0x60] sm:$0xff]
  %v234 = vld [vmem:[%s2 + $0x68] sm:$0xff]
  %v235 = vld [vmem:[%s2 + $0x70] sm:$0xff]
  %v236 = vld [vmem:[%s2 + $0x78] sm:$0xff]
  %v237 = vld [vmem:[%s2 + $0x80] sm:$0xff]
  %v238 = vld [vmem:[%s2 + $0x88] sm:$0xff]
  %v239 = vld [vmem:[%s2 + $0x90] sm:$0xff]
  %v240 = vld [vmem:[%s2 + $0x98] sm:$0xff]
  %v241 = vld [vmem:[%s2 + $0xa0] sm:$0xff]
  %v242 = vld [vmem:[%s2 + $0xa8] sm:$0xff]
  %v243 = vld [vmem:[%s2 + $0xb0] sm:$0xff]
  %v244 = vld [vmem:[%s2 + $0xb8] sm:$0xff]
  %v245 = vld [vmem:[%s2 + $0xc0] sm:$0xff]
  %v246 = vld [vmem:[%s2 + $0xc8] sm:$0xff]
  %v247 = vld [vmem:[%s2 + $0xd0] sm:$0xff]
  %v248 = vld [vmem:[%s2 + $0xd8] sm:$0xff]
  %v249 = vld [vmem:[%s2 + $0xe0] sm:$0xff]
  %v250 = vld [vmem:[%s2 + $0xe8] sm:$0xff]
  %v251 = vld [vmem:[%s2 + $0xf0] sm:$0xff]
  %v252 = vld [vmem:[%s2 + $0xf8] sm:$0xff]
  %s253 = scalar_lea.vmem %s2, 256
  %v254 = vld [vmem:[%s253] ss:$8 sm:$0x3]
  %v256 = vlaneseq
  %v257 = vshrl.u32 %v256, 7
  %v258 = vsub.s32 0, %v257
  %v259 = vrot.slane %v254, %v258
  %v260 = vlaneseq
  %v261 = vshrl.u32 %v260, 7
  %v262 = vsub.s32 1, %v261
  %v263 = vrot.slane %v254, %v262
  %266 = vmatprep.subr.mxu0 %v222
  %267 = vmatpush1.msra.mxu0 %v221
  %268 = vmatprep.subr.mxu0 %v224
  %269 = vmatpush1.msra.mxu0 %v223
  %270 = vmatprep.subr.mxu0 %v226
  %271 = vmatpush1.msra.mxu0 %v225
  %272 = vmatprep.subr.mxu0 %v228
  %273 = vmatpush1.msra.mxu0 %v227
  %274 = vmatprep.subr.mxu0 %v230
  %275 = vmatpush1.msra.mxu0 %v229
  %276 = vmatprep.subr.mxu0 %v232
  %277 = vmatpush1.msra.mxu0 %v231
  %278 = vmatprep.subr.mxu0 %v234
  %279 = vmatpush1.msra.mxu0 %v233
  %280 = vmatprep.subr.mxu0 %v236
  %281 = vmatpush1.msra.mxu0 %v235
  %282 = vmatprep.subr.mxu0 %v238
  %283 = vmatpush1.msra.mxu0 %v237
  %284 = vmatprep.subr.mxu0 %v240
  %285 = vmatpush1.msra.mxu0 %v239
  %286 = vmatprep.subr.mxu0 %v242
  %287 = vmatpush1.msra.mxu0 %v241
  %288 = vmatprep.subr.mxu0 %v244
  %289 = vmatpush1.msra.mxu0 %v243
  %290 = vmatprep.subr.mxu0 %v246
  %291 = vmatpush1.msra.mxu0 %v245
  %292 = vmatprep.subr.mxu0 %v248
  %293 = vmatpush1.msra.mxu0 %v247
  %294 = vmatprep.subr.mxu0 %v250
  %295 = vmatpush1.msra.mxu0 %v249
  %296 = vmatprep.subr.mxu0 %v252
  %297 = vmatpush1.msra.mxu0 %v251
  %298 = vmatprep.subr.mxu0 0.0
  %299 = vmatpush1.msra.mxu0 0.0
  %300 = vmatprep.subr.mxu0 0.0
  %301 = vmatpush1.msra.mxu0 0.0
  %302 = vmatprep.subr.mxu0 0.0
  %303 = vmatpush1.msra.mxu0 0.0
  %304 = vmatprep.subr.mxu0 0.0
  %305 = vmatpush1.msra.mxu0 0.0
  %306 = vmatprep.subr.mxu0 0.0
  %307 = vmatpush1.msra.mxu0 0.0
  %308 = vmatprep.subr.mxu0 0.0
  %309 = vmatpush1.msra.mxu0 0.0
  %310 = vmatprep.subr.mxu0 0.0
  %311 = vmatpush1.msra.mxu0 0.0
  %312 = vmatprep.subr.mxu0 0.0
  %313 = vmatpush1.msra.mxu0 0.0
  %314 = vmatprep.subr.mxu0 0.0
  %315 = vmatpush1.msra.mxu0 0.0
  %316 = vmatprep.subr.mxu0 0.0
  %317 = vmatpush1.msra.mxu0 0.0
  %318 = vmatprep.subr.mxu0 0.0
  %319 = vmatpush1.msra.mxu0 0.0
  %320 = vmatprep.subr.mxu0 0.0
  %321 = vmatpush1.msra.mxu0 0.0
  %322 = vmatprep.subr.mxu0 0.0
  %323 = vmatpush1.msra.mxu0 0.0
  %324 = vmatprep.subr.mxu0 0.0
  %325 = vmatpush1.msra.mxu0 0.0
  %326 = vmatprep.subr.mxu0 0.0
  %327 = vmatpush1.msra.mxu0 0.0
  %328 = vmatprep.subr.mxu0 0.0
  %329 = vmatpush1.msra.mxu0 0.0
  %330 = vmatprep.mubr.f32.mxu0 0.0
  %331 = vmatmul.mubr.f32.gmra.mrb[0].mxu0 %v220
  %v332 = vpop.f32.mrb[0].mxu0
  %v333 = vadd.f32 %v259, %v332
  %v334 = vpop.f32.mrb[0].mxu0
  %v335 = vadd.f32 %v263, %v334
  %336 = vdwg.mxu0
  %v337 = vmul.f32 %v333, 1.442695
  %v338 = vpow.pop %v337
  %v339 = vand.u32 2147483647, %v335
  %vm340 = vcmp.le.f32.partialorder %v339, 0.7853982
  %vm341 = vcmp.lt.s32.totalorder %v335, 0
  %v342 = vand.u32 %v335, 2139095040
  %v343 = vshrl.u32 %v342, 23
  %v344 = vsub.s32 %v343, 127
  %v345 = vand.u32 2147483647, %v335
  %v346 = vand.u32 %v345, 8388607
  %v347 = vor.u32 %v346, 8388608
  %v348 = vsub.s32 0, %v347
  %v349 = vadd.s32 %v344, 1
  %vm350 = vcmp.gt.s32.totalorder %v349, 0
  %v351 = vsel %vm350, %v349, 0
  %v352 = vshrl.u32 %v351, 5
  %v353 = vand.u32 %v351, 31
  %v354 = vsub.s32 32, %v353
  %v355 = vshrl.u32 683565275, %v354
  %v356 = vshll.u32 683565275, %v353
  %v357 = vshrl.u32 2475754826, %v354
  %v358 = vor.u32 %v356, %v357
  %v359 = vshll.u32 2475754826, %v353
  %v360 = vshrl.u32 2131351028, %v354
  %v361 = vor.u32 %v359, %v360
  %v362 = vshll.u32 2131351028, %v353
  %v363 = vshrl.u32 2102212464, %v354
  %v364 = vor.u32 %v362, %v363
  %v365 = vshll.u32 2102212464, %v353
  %v366 = vshrl.u32 920167782, %v354
  %v367 = vor.u32 %v365, %v366
  %v368 = vshll.u32 920167782, %v353
  %v369 = vshrl.u32 1326507024, %v354
  %v370 = vor.u32 %v368, %v369
  %vm371 = vcmp.lt.s32.totalorder %v352, 1
  %vm372 = vcmp.lt.s32.totalorder %v352, 2
  %vm373 = vcmp.lt.s32.totalorder %v352, 3
  %vm374 = vcmp.lt.s32.totalorder %v352, 4
  %v375 = vsel %vm371, %v355, %v358
  %v376 = vsel %vm374, %v364, 2102212464
  %v377 = vsel %vm373, %v361, %v376
  %v378 = vsel %vm372, %v375, %v377
  %v379 = vsel %vm371, %v358, %v361
  %v380 = vsel %vm374, %v367, 920167782
  %v381 = vsel %vm373, %v364, %v380
  %v382 = vsel %vm372, %v379, %v381
  %v383 = vsel %vm371, %v361, %v364
  %v384 = vsel %vm374, %v370, 1326507024
  %v385 = vsel %vm373, %v367, %v384
  %v386 = vsel %vm372, %v383, %v385
  %v387 = vshll.u32 %v347, 8
  %v388 = vmul.u32.u64.compose %v387, %v386
  %v389 = vextract.low.u32 %v388
  %v390 = vextract.high.u32 %v388
  %v391 = vmul.u32.u64.compose %v387, %v382
  %v392 = vextract.low.u32 %v391
  %v393 = vextract.high.u32 %v391
  %v394 = vmul.u32 %v387, %v378
  %v395 = vadd.s32 %v390, %v392
  %vm396 = vc.u32 %v390, %v392
  %v397 = vadd.s32 %v393, 1
  %v398 = vsel %vm396, %v397, %v393
  %v399 = vadd.s32 %v394, %v398
  %v400 = vadd.s32 %v399, 536870912
  %v401 = vshrl.u32 %v400, 30
  %v402 = vshll.u32 %v401, 30
  %v403 = vsub.s32 %v399, %v402
  %vm404 = vcmp.lt.s32.totalorder %v403, 0
  %v405 = vsub.s32 0, %v403
  %v406 = vsel %vm404, %v405, %v403
  %v407 = vclz %v406
  %v408 = vsub.s32 %v407, 2
  %vm409 = vcmp.gt.s32.totalorder 0, %v408
  %v410 = vsel %vm409, 0, %v408
  %v411 = vsub.s32 32, %v410
  %v412 = vshll.u32 %v403, %v410
  %v413 = vshrl.u32 %v395, %v411
  %v414 = vor.u32 %v412, %v413
  %v415 = vsub.s32 4294967266, %v410
  %v416 = vadd.s32 %v415, 127
  %v417 = vshll.u32 %v416, 23
  %v418 = vor.u32 4788187, %v417
  %v419 = vand.u32 2147483647, %v418
  %v421 = vcvt.s32.f32 %v414
  %v422 = vmul.f32 %v421, %v419
  %v423 = vxor.u32 %v422, 2147483648
  %v424 = vsel %vm341, %v423, %v422
  %v425 = vsub.s32 4, %v401
  %v426 = vsel %vm341, %v425, %v401
  %v427 = vsel %vm340, %v335, %v424
  %v428 = vsel %vm340, 0, %v426
  %v429 = vcosq.f32.pop %v427
  %v430 = vsinq.f32.pop %v427
  %vm431 = vweird.f32 %v335
  %v432 = vand.u32 %v428, 3
  %vm433 = vcmp.lt.s32.totalorder %v432, 2
  %vm434 = vcmp.eq.s32.totalorder %v432, 0
  %v435 = vxor.u32 %v430, 2147483648
  %v436 = vsel %vm434, %v429, %v435
  %vm437 = vcmp.eq.s32.totalorder %v432, 2
  %v438 = vxor.u32 %v429, 2147483648
  %v439 = vsel %vm437, %v438, %v430
  %v440 = vsel %vm433, %v436, %v439
  %v441 = vsel %vm431, nan, %v440
  %v442 = vmul.f32 %v338, %v441
  %v443 = vmax.f32 %v442, 0.0
  %v444 = vld [vmem:[%s3] sm:$0xff]
  %v445 = vld [vmem:[%s3 + $0x8] sm:$0xff]
  %v446 = vld [vmem:[%s3 + $0x10] sm:$0xff]
  %v447 = vld [vmem:[%s3 + $0x18] sm:$0xff]
  %v448 = vld [vmem:[%s3 + $0x20] sm:$0xff]
  %v449 = vld [vmem:[%s3 + $0x28] sm:$0xff]
  %v450 = vld [vmem:[%s3 + $0x30] sm:$0xff]
  %v451 = vld [vmem:[%s3 + $0x38] sm:$0xff]
  %v452 = vld [vmem:[%s3 + $0x40] sm:$0xff]
  %v453 = vld [vmem:[%s3 + $0x48] sm:$0xff]
  %v454 = vld [vmem:[%s3 + $0x50] sm:$0xff]
  %v455 = vld [vmem:[%s3 + $0x58] sm:$0xff]
  %v456 = vld [vmem:[%s3 + $0x60] sm:$0xff]
  %v457 = vld [vmem:[%s3 + $0x68] sm:$0xff]
  %v458 = vld [vmem:[%s3 + $0x70] sm:$0xff]
  %v459 = vld [vmem:[%s3 + $0x78] sm:$0xff]
  %v460 = vld [vmem:[%s3 + $0x80] sm:$0x1]
  %v461 = vlaneseq
  %v462 = vshrl.u32 %v461, 7
  %v463 = vsub.s32 0, %v462
  %v464 = vrot.slane %v460, %v463
  %465 = vmatprep.subr.mxu0 0.0
  %466 = vmatpush1.msra.mxu0 %v444
  %467 = vmatprep.subr.mxu0 0.0
  %468 = vmatpush1.msra.mxu0 %v445
  %469 = vmatprep.subr.mxu0 0.0
  %470 = vmatpush1.msra.mxu0 %v446
  %471 = vmatprep.subr.mxu0 0.0
  %472 = vmatpush1.msra.mxu0 %v447
  %473 = vmatprep.subr.mxu0 0.0
  %474 = vmatpush1.msra.mxu0 %v448
  %475 = vmatprep.subr.mxu0 0.0
  %476 = vmatpush1.msra.mxu0 %v449
  %477 = vmatprep.subr.mxu0 0.0
  %478 = vmatpush1.msra.mxu0 %v450
  %479 = vmatprep.subr.mxu0 0.0
  %480 = vmatpush1.msra.mxu0 %v451
  %481 = vmatprep.subr.mxu0 0.0
  %482 = vmatpush1.msra.mxu0 %v452
  %483 = vmatprep.subr.mxu0 0.0
  %484 = vmatpush1.msra.mxu0 %v453
  %485 = vmatprep.subr.mxu0 0.0
  %486 = vmatpush1.msra.mxu0 %v454
  %487 = vmatprep.subr.mxu0 0.0
  %488 = vmatpush1.msra.mxu0 %v455
  %489 = vmatprep.subr.mxu0 0.0
  %490 = vmatpush1.msra.mxu0 %v456
  %491 = vmatprep.subr.mxu0 0.0
  %492 = vmatpush1.msra.mxu0 %v457
  %493 = vmatprep.subr.mxu0 0.0
  %494 = vmatpush1.msra.mxu0 %v458
  %495 = vmatprep.subr.mxu0 0.0
  %496 = vmatpush1.msra.mxu0 %v459
  %497 = vmatprep.subr.mxu0 0.0
  %498 = vmatpush1.msra.mxu0 0.0
  %499 = vmatprep.subr.mxu0 0.0
  %500 = vmatpush1.msra.mxu0 0.0
  %501 = vmatprep.subr.mxu0 0.0
  %502 = vmatpush1.msra.mxu0 0.0
  %503 = vmatprep.subr.mxu0 0.0
  %504 = vmatpush1.msra.mxu0 0.0
  %505 = vmatprep.subr.mxu0 0.0
  %506 = vmatpush1.msra.mxu0 0.0
  %507 = vmatprep.subr.mxu0 0.0
  %508 = vmatpush1.msra.mxu0 0.0
  %509 = vmatprep.subr.mxu0 0.0
  %510 = vmatpush1.msra.mxu0 0.0
  %511 = vmatprep.subr.mxu0 0.0
  %512 = vmatpush1.msra.mxu0 0.0
  %513 = vmatprep.subr.mxu0 0.0
  %514 = vmatpush1.msra.mxu0 0.0
  %515 = vmatprep.subr.mxu0 0.0
  %516 = vmatpush1.msra.mxu0 0.0
  %517 = vmatprep.subr.mxu0 0.0
  %518 = vmatpush1.msra.mxu0 0.0
  %519 = vmatprep.subr.mxu0 0.0
  %520 = vmatpush1.msra.mxu0 0.0
  %521 = vmatprep.subr.mxu0 0.0
  %522 = vmatpush1.msra.mxu0 0.0
  %523 = vmatprep.subr.mxu0 0.0
  %524 = vmatpush1.msra.mxu0 0.0
  %525 = vmatprep.subr.mxu0 0.0
  %526 = vmatpush1.msra.mxu0 0.0
  %527 = vmatprep.subr.mxu0 0.0
  %528 = vmatpush1.msra.mxu0 0.0
  %529 = vmatprep.mubr.f32.mxu0 0.0
  %530 = vmatmul.mubr.f32.gmra.mrb[0].mxu0 %v443
  %v531 = vpop.f32.mrb[0].mxu0
  %v532 = vadd.f32 %v464, %v531
  %v533 = vpop.f32.mrb[0].mxu0
  %534 = vdwg.mxu0
  %v535 = vmul.f32 %v532, 1.442695
  %v536 = vpow.pop %v535
  %v537 = vand.u32 2147483647, %v532
  %vm538 = vcmp.le.f32.partialorder %v537, 0.7853982
  %vm539 = vcmp.lt.s32.totalorder %v532, 0
  %v540 = vand.u32 %v532, 2139095040
  %v541 = vshrl.u32 %v540, 23
  %v542 = vsub.s32 %v541, 127
  %v543 = vand.u32 2147483647, %v532
  %v544 = vand.u32 %v543, 8388607
  %v545 = vor.u32 %v544, 8388608
  %v546 = vsub.s32 0, %v545
  %v547 = vadd.s32 %v542, 1
  %vm548 = vcmp.gt.s32.totalorder %v547, 0
  %v549 = vsel %vm548, %v547, 0
  %v550 = vshrl.u32 %v549, 5
  %v551 = vand.u32 %v549, 31
  %v552 = vsub.s32 32, %v551
  %v553 = vshrl.u32 683565275, %v552
  %v554 = vshll.u32 683565275, %v551
  %v555 = vshrl.u32 2475754826, %v552
  %v556 = vor.u32 %v554, %v555
  %v557 = vshll.u32 2475754826, %v551
  %v558 = vshrl.u32 2131351028, %v552
  %v559 = vor.u32 %v557, %v558
  %v560 = vshll.u32 2131351028, %v551
  %v561 = vshrl.u32 2102212464, %v552
  %v562 = vor.u32 %v560, %v561
  %v563 = vshll.u32 2102212464, %v551
  %v564 = vshrl.u32 920167782, %v552
  %v565 = vor.u32 %v563, %v564
  %v566 = vshll.u32 920167782, %v551
  %v567 = vshrl.u32 1326507024, %v552
  %v568 = vor.u32 %v566, %v567
  %vm569 = vcmp.lt.s32.totalorder %v550, 1
  %vm570 = vcmp.lt.s32.totalorder %v550, 2
  %vm571 = vcmp.lt.s32.totalorder %v550, 3
  %vm572 = vcmp.lt.s32.totalorder %v550, 4
  %v573 = vsel %vm569, %v553, %v556
  %v574 = vsel %vm572, %v562, 2102212464
  %v575 = vsel %vm571, %v559, %v574
  %v576 = vsel %vm570, %v573, %v575
  %v577 = vsel %vm569, %v556, %v559
  %v578 = vsel %vm572, %v565, 920167782
  %v579 = vsel %vm571, %v562, %v578
  %v580 = vsel %vm570, %v577, %v579
  %v581 = vsel %vm569, %v559, %v562
  %v582 = vsel %vm572, %v568, 1326507024
  %v583 = vsel %vm571, %v565, %v582
  %v584 = vsel %vm570, %v581, %v583
  %v585 = vshll.u32 %v545, 8
  %v586 = vmul.u32.u64.compose %v585, %v584
  %v587 = vextract.low.u32 %v586
  %v588 = vextract.high.u32 %v586
  %v589 = vmul.u32.u64.compose %v585, %v580
  %v590 = vextract.low.u32 %v589
  %v591 = vextract.high.u32 %v589
  %v592 = vmul.u32 %v585, %v576
  %v593 = vadd.s32 %v588, %v590
  %vm594 = vc.u32 %v588, %v590
  %v595 = vadd.s32 %v591, 1
  %v596 = vsel %vm594, %v595, %v591
  %v597 = vadd.s32 %v592, %v596
  %v598 = vadd.s32 %v597, 536870912
  %v599 = vshrl.u32 %v598, 30
  %v600 = vshll.u32 %v599, 30
  %v601 = vsub.s32 %v597, %v600
  %vm602 = vcmp.lt.s32.totalorder %v601, 0
  %v603 = vsub.s32 0, %v601
  %v604 = vsel %vm602, %v603, %v601
  %v605 = vclz %v604
  %v606 = vsub.s32 %v605, 2
  %vm607 = vcmp.gt.s32.totalorder 0, %v606
  %v608 = vsel %vm607, 0, %v606
  %v609 = vsub.s32 32, %v608
  %v610 = vshll.u32 %v601, %v608
  %v611 = vshrl.u32 %v593, %v609
  %v612 = vor.u32 %v610, %v611
  %v613 = vsub.s32 4294967266, %v608
  %v614 = vadd.s32 %v613, 127
  %v615 = vshll.u32 %v614, 23
  %v616 = vor.u32 4788187, %v615
  %v617 = vand.u32 2147483647, %v616
  %v619 = vcvt.s32.f32 %v612
  %v620 = vmul.f32 %v619, %v617
  %v621 = vxor.u32 %v620, 2147483648
  %v622 = vsel %vm539, %v621, %v620
  %v623 = vsub.s32 4, %v599
  %v624 = vsel %vm539, %v623, %v599
  %v625 = vsel %vm538, %v532, %v622
  %v626 = vsel %vm538, 0, %v624
  %v627 = vcosq.f32.pop %v625
  %v628 = vsinq.f32.pop %v625
  %vm629 = vweird.f32 %v532
  %v630 = vand.u32 %v626, 3
  %vm631 = vcmp.lt.s32.totalorder %v630, 2
  %vm632 = vcmp.eq.s32.totalorder %v630, 0
  %v633 = vxor.u32 %v628, 2147483648
  %v634 = vsel %vm632, %v627, %v633
  %vm635 = vcmp.eq.s32.totalorder %v630, 2
  %v636 = vxor.u32 %v627, 2147483648
  %v637 = vsel %vm635, %v636, %v628
  %v638 = vsel %vm631, %v634, %v637
  %v639 = vsel %vm629, nan, %v638
  %641 = vrot.lane.b32.xlu0 %v639, 124
  %v642 = vpop.permute.xlu0 %641
  %v644 = vmul.f32 %v536, %v642
  %645 = vst.msk [vmem:[%s4] sm:$0xff] %vm33, %v644
  // Predicated region
  $region18: #{layered_model.1} parent=0 // pred_check
    _
  $region19: #{layered_model.1} parent=0 // pred_check_branch
    %647 = sbr.rel (0) target = $region21
  $region20: #{layered_model.1} parent=0 // pred_region
    _
  $region21: #{layered_model.1} parent=0 // pred_fallthru
    _
  // Predicated region
  $region22: #{layered_model.1} parent=0 // pred_check
    _
  $region23: #{layered_model.1} parent=0 // pred_check_branch
    %649 = sbr.rel (0) target = $region25
  $region24: #{layered_model.1} parent=0 // pred_region
    _
  $region25: #{layered_model.1} parent=0 // pred_fallthru
    _

</llo_original>
